<compile_context>
chip_gen: v7x
topology: tpu7x:2x2x1
jax: 0.10.0
libtpu: 0.0.40
codegen_flags: <defaults>
</compile_context>

<pallas_src>
import functools

import jax
import jax.numpy as jnp
from jax.experimental import pallas as pl
from jax.experimental.pallas import tpu as pltpu


def _swgat_kernel(z_ref, ebase_ref, vmat_ref, tfidf_ref, out_ref):
    # z_ref:     [Ns, D]      f32   sentence projections (resident, constant index_map)
    # ebase_ref: [1, Ns]      f32   z @ a_src + b_feat . a_feat  (per-sentence logit bias)
    # vmat_ref:  [Ns*F, Ns]   bf16/f32  folded feat_fc x attn block matrix (resident)
    # tfidf_ref: [TW, Ns*F]   bf16/f32  lane-dense edge features for this word tile
    # out_ref:   [TW, D]      f32

    # e[w, s] = sum_f tfidf[w, s, f] * v[f]  -- single lane-dense MXU matmul.
    e = jnp.dot(tfidf_ref[...], vmat_ref[...],
                preferred_element_type=jnp.float32)            # [TW, Ns]
    e = e + ebase_ref[...]                                     # add z@a_src + b0

    # LeakyReLU (PyTorch default negative_slope = 0.01).
    e = jnp.where(e >= 0, e, 0.01 * e)

    # Softmax over incoming sentence edges (mailbox dim).
    e_max = jnp.max(e, axis=1, keepdims=True)
    p = jnp.exp(e - e_max)
    denom = jnp.sum(p, axis=1, keepdims=True)
    alpha = p * pl.reciprocal(denom, approx=True)              # EUP slot, ~free

    # out[w] = sum_s alpha[w, s] * z[s]
    out_ref[...] = jnp.dot(alpha, z_ref[...],
                           preferred_element_type=jnp.float32)  # [TW, D]


def _round_up(x, m):
    return ((x + m - 1) // m) * m


@functools.partial(jax.jit, static_argnames=("stream_dtype", "max_tile_w",
                                             "vmem_budget_bytes"))
def swgat_layer(h_s, tfidf, w_fc, w_feat, b_feat, w_attn, *,
                stream_dtype=jnp.bfloat16,
                max_tile_w=512,
                vmem_budget_bytes=8 * 1024 * 1024):
    """h_s: [Ns, in_dim], tfidf: [Nw, Ns, F]. Returns [Nw, out_dim] (f32)."""
    ns, in_dim = h_s.shape
    nw, ns2, f = tfidf.shape
    assert ns == ns2
    d = w_fc.shape[0]
    f32 = jnp.float32

    # ---- One-time (per call) precompute in plain XLA: nothing here is per-tile. ----
    h_s = h_s.astype(f32)
    z = jnp.dot(h_s, w_fc.T.astype(f32))                        # [Ns, D]
    a = w_attn.reshape(-1).astype(f32)
    a_src = a[:d]
    a_feat = a[2 * d:]                                          # z_dst chunk a[d:2d] hits zeros
    # Exact fold of attn_fc into feat_fc (dfeat only enters through a_feat).
    v = jnp.dot(w_feat.T.astype(f32), a_feat)                   # [F]
    b0 = jnp.dot(b_feat.astype(f32), a_feat)                    # scalar
    e_base = (jnp.dot(z, a_src) + b0).reshape(1, ns)            # [1, Ns]
    # Block matrix so e_feat is one lane-dense MXU matmul:
    #   V[s*F + fi, s'] = v[fi] * (s == s')
    vmat = jnp.kron(jnp.eye(ns, dtype=f32),
                    v.reshape(f, 1)).astype(stream_dtype)       # [Ns*F, Ns]

    # ---- Tile sizing: big word tiles, bounded by a conservative VMEM budget ----
    # (fits the default scoped VMEM on v5e/v6e and the 64 MiB v7x VMEM with room
    #  for double-buffering the stream).
    bytes_per_row = ns * f * jnp.dtype(stream_dtype).itemsize
    tile_cap = max(8, int(vmem_budget_bytes // (2 * bytes_per_row)))
    tile_w = min(max_tile_w, tile_cap, _round_up(nw, 8))
    tile_w = max(8, (tile_w // 8) * 8)
    nw_pad = _round_up(nw, tile_w)

    # Lane-dense stream: [Nw, Ns*F] is a free (contiguous) reshape of [Nw, Ns, F].
    tfidf2 = tfidf.reshape(nw, ns * f).astype(stream_dtype)
    if nw_pad != nw:
        # Zero padding keeps the softmax rows finite; padded rows are sliced off.
        tfidf2 = jnp.pad(tfidf2, ((0, nw_pad - nw), (0, 0)))

    grid = (nw_pad // tile_w,)
    out = pl.pallas_call(
        _swgat_kernel,
        out_shape=jax.ShapeDtypeStruct((nw_pad, d), f32),
        grid_spec=pltpu.PrefetchScalarGridSpec(
            num_scalar_prefetch=0,
            grid=grid,
            in_specs=[
                pl.BlockSpec((ns, d), lambda i: (0, 0)),           # z (resident)
                pl.BlockSpec((1, ns), lambda i: (0, 0)),           # e_src + b0 (resident)
                pl.BlockSpec((ns * f, ns), lambda i: (0, 0)),      # folded feat matrix (resident)
                pl.BlockSpec((tile_w, ns * f), lambda i: (i, 0)),  # tfidf stream (per tile)
            ],
            out_specs=pl.BlockSpec((tile_w, d), lambda i: (i, 0)),
        ),
        compiler_params=pltpu.CompilerParams(
            dimension_semantics=("parallel",),
            vmem_limit_bytes=32 * 1024 * 1024),
    )(z, e_base, vmat, tfidf2)
    return out[:nw]


def swgat_reference(h_s, tfidf, w_fc, w_feat, b_feat, w_attn):
    """Pure-f32 reference following the original (unfolded) module semantics."""
    d = w_fc.shape[0]
    z = h_s @ w_fc.T                                    # [Ns, D]
    dfeat = tfidf @ w_feat.T + b_feat                   # [Nw, Ns, D]
    a = w_attn.reshape(-1)
    # word-node 'z' is zero-filled by DGL, so the middle chunk of a contributes 0.
    e = (z @ a[:d])[None, :] + dfeat @ a[2 * d:]        # [Nw, Ns]
    e = jnp.where(e >= 0, e, 0.01 * e)
    alpha = jax.nn.softmax(e, axis=1)
    return alpha @ z                                    # [Nw, D]


if __name__ == "__main__":
    in_dim, out_dim, feat_embed_size = 32, 32, 16
    ns, nw = 8, 16  # sentence nodes, word nodes

    key = jax.random.PRNGKey(0)
    k1, k2, k3, k4, k5, k6 = jax.random.split(key, 6)

    # Deterministic parameter init (PyTorch Linear weight shapes).
    w_fc = jax.random.normal(k1, (out_dim, in_dim), jnp.float32) * 0.1
    w_feat = jax.random.normal(k2, (out_dim, feat_embed_size), jnp.float32) * 0.1
    b_feat = jax.random.normal(k3, (out_dim,), jnp.float32) * 0.1
    w_attn = jax.random.normal(k4, (1, 3 * out_dim), jnp.float32) * 0.1

    # Inputs: sentence-node features and per-edge tfidf embeddings.
    h_s = jax.random.normal(k5, (ns, in_dim), jnp.float32)
    tfidf = jax.random.normal(k6, (nw, ns, feat_embed_size), jnp.float32)

    ref = swgat_reference(h_s, tfidf, w_fc, w_feat, b_feat, w_attn)

    # Exact-dtype path (f32 stream): tight check of the folded/hoisted kernel.
    out_f32 = swgat_layer(h_s, tfidf, w_fc, w_feat, b_feat, w_attn,
                          stream_dtype=jnp.float32)
    out_f32 = jax.block_until_ready(out_f32)
    assert out_f32.shape == (nw, out_dim)
    assert jnp.allclose(out_f32, ref, atol=3e-3, rtol=3e-3), "f32 mismatch vs reference"

    # Default perf path (bf16 tfidf streaming): looser tolerance from the cast.
    out_bf16 = swgat_layer(h_s, tfidf, w_fc, w_feat, b_feat, w_attn)
    out_bf16 = jax.block_until_ready(out_bf16)
    assert out_bf16.shape == (nw, out_dim)
    assert jnp.allclose(out_bf16, ref, atol=5e-2, rtol=5e-2), "bf16 mismatch vs reference"

    print("KERNEL_OK")
</pallas_src>

<mosaic_0001>
module attributes {stable_mosaic.version = 11 : i64} {
  func.func @_swgat_kernel(%arg0: i32, %arg1: memref<8x32xf32, #tpu.memory_space<vmem>>, %arg2: memref<1x8xf32, #tpu.memory_space<vmem>>, %arg3: memref<128x8xf32, #tpu.memory_space<vmem>>, %arg4: memref<16x128xf32, #tpu.memory_space<vmem>>, %arg5: memref<16x32xf32, #tpu.memory_space<vmem>>) attributes {dimension_semantics = [#tpu.dimension_semantics<parallel>], iteration_bounds = array<i64: 1>, scalar_prefetch = 0 : i64, scratch_operands = 0 : i64, tpu.core_type = #tpu.core_type<tc>, window_params = [{pipeline_mode = #tpu.pipeline_mode<synchronous>, transform_indices = @transform_0, window_bounds = array<i64: 8, 32>}, {pipeline_mode = #tpu.pipeline_mode<synchronous>, transform_indices = @transform_1, window_bounds = array<i64: 1, 8>}, {pipeline_mode = #tpu.pipeline_mode<synchronous>, transform_indices = @transform_2, window_bounds = array<i64: 128, 8>}, {transform_indices = @transform_3, window_bounds = array<i64: 16, 128>}, {transform_indices = @transform_4, window_bounds = array<i64: 16, 32>}]} {
    %c0 = arith.constant 0 : index
    %c0_0 = arith.constant 0 : index
    %0 = vector.load %arg4[%c0, %c0_0] : memref<16x128xf32, #tpu.memory_space<vmem>>, vector<16x128xf32>
    %c0_1 = arith.constant 0 : index
    %c0_2 = arith.constant 0 : index
    %1 = vector.load %arg3[%c0_1, %c0_2] : memref<128x8xf32, #tpu.memory_space<vmem>>, vector<128x8xf32>
    %cst = arith.constant dense<0.000000e+00> : vector<16x8xf32>
    %2 = tpu.matmul %0, %1, %cst {dimension_numbers = #tpu.dot_dimension_numbers<[1], [0], [0], [1], [0, 0, 1, 1], [], []>} : vector<16x128xf32>, vector<128x8xf32>, vector<16x8xf32> -> vector<16x8xf32>
    %c0_3 = arith.constant 0 : index
    %c0_4 = arith.constant 0 : index
    %3 = vector.load %arg2[%c0_3, %c0_4] : memref<1x8xf32, #tpu.memory_space<vmem>>, vector<1x8xf32>
    %4 = vector.broadcast %3 : vector<1x8xf32> to vector<16x8xf32>
    %5 = arith.addf %2, %4 : vector<16x8xf32>
    %cst_5 = arith.constant 0.000000e+00 : f32
    %6 = vector.broadcast %cst_5 : f32 to vector<16x8xf32>
    %7 = arith.cmpf oge, %5, %6 : vector<16x8xf32>
    %cst_6 = arith.constant 0.00999999977 : f32
    %8 = vector.broadcast %cst_6 : f32 to vector<16x8xf32>
    %9 = arith.mulf %8, %5 : vector<16x8xf32>
    %10 = arith.select %7, %5, %9 : vector<16x8xi1>, vector<16x8xf32>
    %cst_7 = arith.constant dense<0xFF800000> : vector<16xf32>
    %11 = vector.multi_reduction <maximumf>, %10, %cst_7 [1] : vector<16x8xf32> to vector<16xf32>
    %12 = vector.shape_cast %11 : vector<16xf32> to vector<16x1xf32>
    %13 = vector.broadcast %12 : vector<16x1xf32> to vector<16x8xf32>
    %14 = arith.subf %10, %13 : vector<16x8xf32>
    %15 = math.exp %14 : vector<16x8xf32>
    %cst_8 = arith.constant dense<0.000000e+00> : vector<16xf32>
    %16 = vector.multi_reduction <add>, %15, %cst_8 [1] : vector<16x8xf32> to vector<16xf32>
    %17 = vector.shape_cast %16 : vector<16xf32> to vector<16x1xf32>
    %18 = tpu.reciprocal %17 {approx = true} : vector<16x1xf32> -> vector<16x1xf32>
    %19 = vector.broadcast %18 : vector<16x1xf32> to vector<16x8xf32>
    %20 = arith.mulf %15, %19 : vector<16x8xf32>
    %c0_9 = arith.constant 0 : index
    %c0_10 = arith.constant 0 : index
    %21 = vector.load %arg1[%c0_9, %c0_10] : memref<8x32xf32, #tpu.memory_space<vmem>>, vector<8x32xf32>
    %cst_11 = arith.constant dense<0.000000e+00> : vector<16x32xf32>
    %22 = tpu.matmul %20, %21, %cst_11 {dimension_numbers = #tpu.dot_dimension_numbers<[1], [0], [0], [1], [0, 0, 1, 1], [], []>} : vector<16x8xf32>, vector<8x32xf32>, vector<16x32xf32> -> vector<16x32xf32>
    %c0_12 = arith.constant 0 : index
    %c0_13 = arith.constant 0 : index
    %23 = vector.load %arg5[%c0_12, %c0_13] : memref<16x32xf32, #tpu.memory_space<vmem>>, vector<16x32xf32>
    tpu.vector_store %arg5[%c0_12, %c0_13], %22 {strides = array<i32>} : memref<16x32xf32, #tpu.memory_space<vmem>>, vector<16x32xf32>,
    return
  }
  func.func @transform_0(%arg0: i32) -> (i32, i32) {
    %c0_i32 = arith.constant 0 : i32
    %c0_i32_0 = arith.constant 0 : i32
    %c0_i32_1 = arith.constant 0 : i32
    return %c0_i32, %c0_i32_0 : i32, i32
  }
  func.func @transform_1(%arg0: i32) -> (i32, i32) {
    %c0_i32 = arith.constant 0 : i32
    %c0_i32_0 = arith.constant 0 : i32
    %c0_i32_1 = arith.constant 0 : i32
    return %c0_i32, %c0_i32_0 : i32, i32
  }
  func.func @transform_2(%arg0: i32) -> (i32, i32) {
    %c0_i32 = arith.constant 0 : i32
    %c0_i32_0 = arith.constant 0 : i32
    %c0_i32_1 = arith.constant 0 : i32
    return %c0_i32, %c0_i32_0 : i32, i32
  }
  func.func @transform_3(%arg0: i32) -> (i32, i32) {
    %c0_i32 = arith.constant 0 : i32
    %c0_i32_0 = arith.constant 0 : i32
    return %arg0, %c0_i32 : i32, i32
  }
  func.func @transform_4(%arg0: i32) -> (i32, i32) {
    %c0_i32 = arith.constant 0 : i32
    %c0_i32_0 = arith.constant 0 : i32
    return %arg0, %c0_i32 : i32, i32
  }
}

</mosaic_0001>

<llo_original>
// kernel: swgat_layer.1
$region0: #{swgat_layer.1}
  #allocation0 [shape = 'u32[]', space=smem, size = 0x4, offset = 0x4, fixed_abs, tag = 'smem constant byte address 0x4 - core index']
  #allocation1 [shape = 'u32[144,128]{1,0:T(1,128)}', space=vmem, size = 0x12000, scoped, tag = 'internal scratch']
  %s0 = inlined_call_operand.vmem [shape: f32[8,32], index: 0, kind: input, shape index: {}]
  %s1 = inlined_call_operand.vmem [shape: f32[1,8], index: 1, kind: input, shape index: {}]
  %s2 = inlined_call_operand.vmem [shape: f32[128,8], index: 2, kind: input, shape index: {}]
  %s3 = inlined_call_operand.vmem [shape: f32[16,128], index: 3, kind: input, shape index: {}]
  %s4 = inlined_call_operand.hbm [shape: f32[16,32], index: 4, kind: output, shape index: {}]
  %s5 = sld [smem:[#allocation0]]
  $region26: #{swgat_layer.1} parent=0
    _
  %s7 = ssub.s32 1, %s5
  %s8 = scalar_select 0, %s7, %s5
  $region1: #{swgat_layer.1} parent=0
    #allocation2 [shape = 'u8[8192]{0}', space=vmem, size = 0x2000, scoped, tag = 'output window, operand 0, single buffered']
    #allocation3 [shape = 's32[1]{0}', space=sflag, size = 0x4, scoped, tag = 'scoped memory for swgat_layer.1']
    %9 = vsyncpa [#allocation3], 0
    // Predicated region
    $region2: #{swgat_layer.1} parent=1 // pred_check
      _
    $region3: #{swgat_layer.1} parent=1 // pred_check_branch
      %11 = sbr.rel (0) target = $region5
    $region4: #{swgat_layer.1} parent=1 // pred_region
      _
    $region5: #{swgat_layer.1} parent=1 // pred_fallthru
      _
    // Predicated region
    $region6: #{swgat_layer.1} parent=1 // pred_check
      _
    $region7: #{swgat_layer.1} parent=1 // pred_check_branch
      %13 = sbr.rel (0) target = $region9
    $region8: #{swgat_layer.1} parent=1 // pred_region
      _
    $region9: #{swgat_layer.1} parent=1 // pred_fallthru
      _
    // Predicated region
    $region10: #{swgat_layer.1} parent=1 // pred_check
      _
    $region11: #{swgat_layer.1} parent=1 // pred_check_branch
      %15 = sbr.rel (0) target = $region13
    $region12: #{swgat_layer.1} parent=1 // pred_region
      _
    $region13: #{swgat_layer.1} parent=1 // pred_fallthru
      _
    // Predicated region
    $region14: #{swgat_layer.1} parent=1 // pred_check
      _
    $region15: #{swgat_layer.1} parent=1 // pred_check_branch
      %17 = sbr.rel (0) target = $region17
    $region16: #{swgat_layer.1} parent=1 // pred_region
      _
    $region17: #{swgat_layer.1} parent=1 // pred_fallthru
      _
    %v18 = vld [vmem:[%s3] sm:$0xff]
    %v19 = vld [vmem:[%s3 + $0x8] sm:$0xff]
    %v20 = vld [vmem:[%s2] sm:$0xff]
    %v21 = vld [vmem:[%s2 + $0x8] sm:$0xff]
    %v22 = vld [vmem:[%s2 + $0x10] sm:$0xff]
    %v23 = vld [vmem:[%s2 + $0x18] sm:$0xff]
    %v24 = vld [vmem:[%s2 + $0x20] sm:$0xff]
    %v25 = vld [vmem:[%s2 + $0x28] sm:$0xff]
    %v26 = vld [vmem:[%s2 + $0x30] sm:$0xff]
    %v27 = vld [vmem:[%s2 + $0x38] sm:$0xff]
    %v28 = vld [vmem:[%s2 + $0x40] sm:$0xff]
    %v29 = vld [vmem:[%s2 + $0x48] sm:$0xff]
    %v30 = vld [vmem:[%s2 + $0x50] sm:$0xff]
    %v31 = vld [vmem:[%s2 + $0x58] sm:$0xff]
    %v32 = vld [vmem:[%s2 + $0x60] sm:$0xff]
    %v33 = vld [vmem:[%s2 + $0x68] sm:$0xff]
    %v34 = vld [vmem:[%s2 + $0x70] sm:$0xff]
    %v35 = vld [vmem:[%s2 + $0x78] sm:$0xff]
    %v36 = vld [vmem:[%s1] sm:$0x1]
    %v38 = vlaneseq
    %v39 = vshrl.u32 %v38, 7
    %v40 = vsub.s32 0, %v39
    %v41 = vrot.slane %v36, %v40
    %43 = vmatprep.subr.mxu0 0.0
    %44 = vmatpush1.msra.mxu0 %v20
    %45 = vmatprep.subr.mxu0 0.0
    %46 = vmatpush1.msra.mxu0 %v21
    %47 = vmatprep.subr.mxu0 0.0
    %48 = vmatpush1.msra.mxu0 %v22
    %49 = vmatprep.subr.mxu0 0.0
    %50 = vmatpush1.msra.mxu0 %v23
    %51 = vmatprep.subr.mxu0 0.0
    %52 = vmatpush1.msra.mxu0 %v24
    %53 = vmatprep.subr.mxu0 0.0
    %54 = vmatpush1.msra.mxu0 %v25
    %55 = vmatprep.subr.mxu0 0.0
    %56 = vmatpush1.msra.mxu0 %v26
    %57 = vmatprep.subr.mxu0 0.0
    %58 = vmatpush1.msra.mxu0 %v27
    %59 = vmatprep.subr.mxu0 0.0
    %60 = vmatpush1.msra.mxu0 %v28
    %61 = vmatprep.subr.mxu0 0.0
    %62 = vmatpush1.msra.mxu0 %v29
    %63 = vmatprep.subr.mxu0 0.0
    %64 = vmatpush1.msra.mxu0 %v30
    %65 = vmatprep.subr.mxu0 0.0
    %66 = vmatpush1.msra.mxu0 %v31
    %67 = vmatprep.subr.mxu0 0.0
    %68 = vmatpush1.msra.mxu0 %v32
    %69 = vmatprep.subr.mxu0 0.0
    %70 = vmatpush1.msra.mxu0 %v33
    %71 = vmatprep.subr.mxu0 0.0
    %72 = vmatpush1.msra.mxu0 %v34
    %73 = vmatprep.subr.mxu0 0.0
    %74 = vmatpush1.msra.mxu0 %v35
    %75 = vmatprep.subr.mxu0 0.0
    %76 = vmatpush1.msra.mxu0 0.0
    %77 = vmatprep.subr.mxu0 0.0
    %78 = vmatpush1.msra.mxu0 0.0
    %79 = vmatprep.subr.mxu0 0.0
    %80 = vmatpush1.msra.mxu0 0.0
    %81 = vmatprep.subr.mxu0 0.0
    %82 = vmatpush1.msra.mxu0 0.0
    %83 = vmatprep.subr.mxu0 0.0
    %84 = vmatpush1.msra.mxu0 0.0
    %85 = vmatprep.subr.mxu0 0.0
    %86 = vmatpush1.msra.mxu0 0.0
    %87 = vmatprep.subr.mxu0 0.0
    %88 = vmatpush1.msra.mxu0 0.0
    %89 = vmatprep.subr.mxu0 0.0
    %90 = vmatpush1.msra.mxu0 0.0
    %91 = vmatprep.subr.mxu0 0.0
    %92 = vmatpush1.msra.mxu0 0.0
    %93 = vmatprep.subr.mxu0 0.0
    %94 = vmatpush1.msra.mxu0 0.0
    %95 = vmatprep.subr.mxu0 0.0
    %96 = vmatpush1.msra.mxu0 0.0
    %97 = vmatprep.subr.mxu0 0.0
    %98 = vmatpush1.msra.mxu0 0.0
    %99 = vmatprep.subr.mxu0 0.0
    %100 = vmatpush1.msra.mxu0 0.0
    %101 = vmatprep.subr.mxu0 0.0
    %102 = vmatpush1.msra.mxu0 0.0
    %103 = vmatprep.subr.mxu0 0.0
    %104 = vmatpush1.msra.mxu0 0.0
    %105 = vmatprep.subr.mxu0 0.0
    %106 = vmatpush1.msra.mxu0 0.0
    %107 = vmatprep.mubr.f32.mxu0 0.0
    %108 = vmatmul.mubr.f32.gmra.mrb[0].mxu0 %v18
    %v109 = vpop.f32.mrb[0].mxu0
    %v110 = vadd.f32 %v41, %v109
    %v111 = vpop.f32.mrb[0].mxu0
    %112 = vmatprep.mubr.f32.mxu0 0.0
    %113 = vmatmul.mubr.f32.gmra.mrb[0].mxu0 %v19
    %v114 = vpop.f32.mrb[0].mxu0
    %v115 = vadd.f32 %v41, %v114
    %v116 = vpop.f32.mrb[0].mxu0
    %117 = vdwg.mxu0
    %vm118 = vcmp.ge.f32.partialorder %v110, 0.0
    %vm119 = vcmp.ge.f32.partialorder %v115, 0.0
    %v120 = vmul.f32 %v110, 0.01
    %v121 = vmul.f32 %v115, 0.01
    %v122 = vsel %vm118, %v110, %v120
    %v123 = vsel %vm119, %v115, %v121
    %vm124 = vcmask 64512
    %v125 = vsel %vm124, %v122, -inf
    %126 = vmax.xlane.f32.xlu0 %v125
    %v127 = vpop.xlane.xlu0 %126
    %v128 = vsel %vm124, %v123, -inf
    %129 = vmax.xlane.f32.xlu0 %v128
    %v130 = vpop.xlane.xlu0 %129
    %v131 = vsub.f32 %v122, %v127
    %v132 = vsub.f32 %v123, %v130
    %v133 = vmul.f32 %v131, 1.442695
    %v134 = vpow.pop %v133
    %v135 = vmul.f32 %v132, 1.442695
    %v136 = vpow.pop %v135
    %v137 = vsel %vm124, %v134, 0.0
    %138 = vadd.xlane.f32.xlu0 %v137
    %v139 = vpop.xlane.xlu0 %138
    %v140 = vsel %vm124, %v136, 0.0
    %141 = vadd.xlane.f32.xlu0 %v140
    %v142 = vpop.xlane.xlu0 %141
    %v143 = vrcp.pop %v139
    %v144 = vrcp.pop %v142
    %v145 = vmul.f32 %v134, %v143
    %v146 = vmul.f32 %v136, %v144
    %v147 = vld [vmem:[%s0] sm:$0xff]
    %v149 = vsel %vm124, %v145, 0
    %v152 = vsel %vm124, %v146, 0
    %154 = vmatprep.subr.mxu0 0.0
    %155 = vmatpush1.msra.mxu0 %v147
    %156 = vmatprep.subr.mxu0 0.0
    %157 = vmatpush1.msra.mxu0 0.0
    %158 = vmatprep.subr.mxu0 0.0
    %159 = vmatpush1.msra.mxu0 0.0
    %160 = vmatprep.subr.mxu0 0.0
    %161 = vmatpush1.msra.mxu0 0.0
    %162 = vmatprep.subr.mxu0 0.0
    %163 = vmatpush1.msra.mxu0 0.0
    %164 = vmatprep.subr.mxu0 0.0
    %165 = vmatpush1.msra.mxu0 0.0
    %166 = vmatprep.subr.mxu0 0.0
    %167 = vmatpush1.msra.mxu0 0.0
    %168 = vmatprep.subr.mxu0 0.0
    %169 = vmatpush1.msra.mxu0 0.0
    %170 = vmatprep.subr.mxu0 0.0
    %171 = vmatpush1.msra.mxu0 0.0
    %172 = vmatprep.subr.mxu0 0.0
    %173 = vmatpush1.msra.mxu0 0.0
    %174 = vmatprep.subr.mxu0 0.0
    %175 = vmatpush1.msra.mxu0 0.0
    %176 = vmatprep.subr.mxu0 0.0
    %177 = vmatpush1.msra.mxu0 0.0
    %178 = vmatprep.subr.mxu0 0.0
    %179 = vmatpush1.msra.mxu0 0.0
    %180 = vmatprep.subr.mxu0 0.0
    %181 = vmatpush1.msra.mxu0 0.0
    %182 = vmatprep.subr.mxu0 0.0
    %183 = vmatpush1.msra.mxu0 0.0
    %184 = vmatprep.subr.mxu0 0.0
    %185 = vmatpush1.msra.mxu0 0.0
    %186 = vmatprep.subr.mxu0 0.0
    %187 = vmatpush1.msra.mxu0 0.0
    %188 = vmatprep.subr.mxu0 0.0
    %189 = vmatpush1.msra.mxu0 0.0
    %190 = vmatprep.subr.mxu0 0.0
    %191 = vmatpush1.msra.mxu0 0.0
    %192 = vmatprep.subr.mxu0 0.0
    %193 = vmatpush1.msra.mxu0 0.0
    %194 = vmatprep.subr.mxu0 0.0
    %195 = vmatpush1.msra.mxu0 0.0
    %196 = vmatprep.subr.mxu0 0.0
    %197 = vmatpush1.msra.mxu0 0.0
    %198 = vmatprep.subr.mxu0 0.0
    %199 = vmatpush1.msra.mxu0 0.0
    %200 = vmatprep.subr.mxu0 0.0
    %201 = vmatpush1.msra.mxu0 0.0
    %202 = vmatprep.subr.mxu0 0.0
    %203 = vmatpush1.msra.mxu0 0.0
    %204 = vmatprep.subr.mxu0 0.0
    %205 = vmatpush1.msra.mxu0 0.0
    %206 = vmatprep.subr.mxu0 0.0
    %207 = vmatpush1.msra.mxu0 0.0
    %208 = vmatprep.subr.mxu0 0.0
    %209 = vmatpush1.msra.mxu0 0.0
    %210 = vmatprep.subr.mxu0 0.0
    %211 = vmatpush1.msra.mxu0 0.0
    %212 = vmatprep.subr.mxu0 0.0
    %213 = vmatpush1.msra.mxu0 0.0
    %214 = vmatprep.subr.mxu0 0.0
    %215 = vmatpush1.msra.mxu0 0.0
    %216 = vmatprep.subr.mxu0 0.0
    %217 = vmatpush1.msra.mxu0 0.0
    %218 = vmatprep.mubr.f32.mxu0 0.0
    %219 = vmatmul.mubr.f32.gmra.mrb[0].mxu0 %v149
    %v220 = vpop.f32.mrb[0].mxu0
    %v221 = vadd.f32 0.0, %v220
    %v222 = vpop.f32.mrb[0].mxu0
    %223 = vmatprep.mubr.f32.mxu0 0.0
    %224 = vmatmul.mubr.f32.gmra.mrb[0].mxu0 %v152
    %v225 = vpop.f32.mrb[0].mxu0
    %v226 = vadd.f32 0.0, %v225
    %v227 = vpop.f32.mrb[0].mxu0
    %228 = vdwg.mxu0
    %vm229 = vcmask 261120
    %230 = vst.msk [vmem:[#allocation2] sm:$0xff] %vm229, %v221
    %231 = vst.msk [vmem:[#allocation2 + $0x8] sm:$0xff] %vm229, %v226
    // Predicated region
    $region18: #{swgat_layer.1} parent=1 // pred_check
      _
    $region19: #{swgat_layer.1} parent=1 // pred_check_branch
      %233 = sbr.rel (0) target = $region21
    $region20: #{swgat_layer.1} parent=1 // pred_region
      %s235 = ssub.s32 256, 256
      %236 = vsyncadd [#allocation3], %s235
      %s237 = sshll.u32 [#allocation2], 4
      %s238 = int_to_ptr.vmem [resolvable:$true] %s237
      %243 = dma.vmem_to_hbm [thread:$0]  %s238, 256, %s4, [#allocation3], 128, 128, 8
    $region21: #{swgat_layer.1} parent=1 // pred_fallthru
      _
    // Predicated region
    $region22: #{swgat_layer.1} parent=1 // pred_check
      _
    $region23: #{swgat_layer.1} parent=1 // pred_check_branch
      %245 = sbr.rel (0) target = $region25
    $region24: #{swgat_layer.1} parent=1 // pred_region
      %246 = dma.done [#allocation3], 256
    $region25: #{swgat_layer.1} parent=1 // pred_fallthru
      _
    %247 = vsyncpa [#allocation3], 1

</llo_original>
